<compile_context>
chip_gen: v6e
topology: v6e:2x2x1
jax: 0.10.0
libtpu: 0.0.40
codegen_flags: <defaults>
</compile_context>

<pallas_src>
import jax
import jax.numpy as jnp
from jax.experimental import pallas as pl
from jax.experimental.pallas import tpu as pltpu

_LANES = 128
# 4096 rows x 128 lanes x 4 B = 2 MiB per block; with in+out double-buffering
# (~8 MiB) this fits comfortably inside the default scoped VMEM on v5e/v6e/v7x.
_MAX_BLOCK_ROWS = 4096


def _copy_kernel(x_ref, o_ref):
    # Identity copy of the current (block_rows, 128) lane-dense tile.
    o_ref[...] = x_ref[...]


def pallas_passthrough(x):
    """Identity pass-through of an arbitrary-shaped tensor via a lane-dense
    2D Pallas copy. Ideally this op is a no-op; the kernel is kept minimal."""
    orig_shape = x.shape
    dtype = x.dtype
    total = int(x.size)

    flat = x.reshape(-1)
    rows_needed = pl.cdiv(total, _LANES)

    if rows_needed <= _MAX_BLOCK_ROWS:
        # Whole tensor in one block, one grid step: zero per-step overhead.
        rows = rows_needed
        block_rows = rows
        grid = (1,)
    else:
        # Large tensor: tile rows; block_rows is a multiple of 8 (sublane rule).
        block_rows = _MAX_BLOCK_ROWS
        rows = pl.cdiv(rows_needed, block_rows) * block_rows
        grid = (rows // block_rows,)

    pad = rows * _LANES - total
    if pad:
        flat = jnp.pad(flat, (0, pad))
    slab = flat.reshape(rows, _LANES)

    # Megacore sharding only pays off with a real grid; tiny grids stay serial.
    semantics = ("parallel",) if grid[0] >= 2 else ("arbitrary",)

    out = pl.pallas_call(
        _copy_kernel,
        out_shape=jax.ShapeDtypeStruct((rows, _LANES), dtype),
        grid=grid,
        in_specs=[pl.BlockSpec((block_rows, _LANES), lambda i: (i, 0))],
        out_specs=pl.BlockSpec((block_rows, _LANES), lambda i: (i, 0)),
        input_output_aliases={0: 0},
        compiler_params=pltpu.CompilerParams(dimension_semantics=semantics),
    )(slab)

    out = out.reshape(-1)
    if pad:
        out = out[:total]
    return out.reshape(orig_shape)


class DictTensorConverter:
    """JAX/Pallas port of the PyTorch DictTensorConverter module.

    forward(x): if x is a dict containing 'sem_seg', return that tensor
    (routed through a minimal Pallas identity kernel). Otherwise print the
    keys and return None, mirroring the PyTorch behavior.
    """

    def __init__(self):
        self.keys = None

    def forward(self, x):
        print(f"type(x) = {type(x)!r}")
        if isinstance(x, dict):
            self.keys = x.keys()
        # Guard: if x was never a dict, self.keys is None -> treat as invalid.
        if self.keys is not None and "sem_seg" in self.keys:
            return pallas_passthrough(x["sem_seg"])
        else:
            print("Invalid keys")
            if self.keys is not None:
                for key in self.keys:
                    print(key)
            return None

    __call__ = forward


if __name__ == "__main__":
    key = jax.random.PRNGKey(0)
    # Small NCHW 'sem_seg' logits: batch=2, classes=4, spatial=16x16.
    sem_seg = jax.random.normal(key, (2, 4, 16, 16), dtype=jnp.float32)
    inputs = {"sem_seg": sem_seg, "instances": None}

    mod = DictTensorConverter()
    out = mod(inputs)
    out = jax.block_until_ready(out)

    assert out.shape == sem_seg.shape and out.dtype == sem_seg.dtype
    assert bool(jnp.all(out == sem_seg))
    print("KERNEL_OK")
</pallas_src>

<mosaic_0001>
module attributes {stable_mosaic.version = 11 : i64} {
  func.func @_copy_kernel(%arg0: i32, %arg1: memref<16x128xf32, #tpu.memory_space<vmem>>, %arg2: memref<16x128xf32, #tpu.memory_space<vmem>>) attributes {dimension_semantics = [#tpu.dimension_semantics<arbitrary>], iteration_bounds = array<i64: 1>, scalar_prefetch = 0 : i64, scratch_operands = 0 : i64, tpu.core_type = #tpu.core_type<tc>, window_params = [{transform_indices = @transform_0, window_bounds = array<i64: 16, 128>}, {transform_indices = @transform_1, window_bounds = array<i64: 16, 128>}]} {
    %c0 = arith.constant 0 : index
    %c0_0 = arith.constant 0 : index
    %0 = vector.load %arg1[%c0, %c0_0] : memref<16x128xf32, #tpu.memory_space<vmem>>, vector<16x128xf32>
    %c0_1 = arith.constant 0 : index
    %c0_2 = arith.constant 0 : index
    %1 = vector.load %arg2[%c0_1, %c0_2] : memref<16x128xf32, #tpu.memory_space<vmem>>, vector<16x128xf32>
    tpu.vector_store %arg2[%c0_1, %c0_2], %0 {strides = array<i32>} : memref<16x128xf32, #tpu.memory_space<vmem>>, vector<16x128xf32>,
    return
  }
  func.func @transform_0(%arg0: i32) -> (i32, i32) {
    %c0_i32 = arith.constant 0 : i32
    %c0_i32_0 = arith.constant 0 : i32
    return %arg0, %c0_i32 : i32, i32
  }
  func.func @transform_1(%arg0: i32) -> (i32, i32) {
    %c0_i32 = arith.constant 0 : i32
    %c0_i32_0 = arith.constant 0 : i32
    return %arg0, %c0_i32 : i32, i32
  }
}

</mosaic_0001>

<llo_original>
// kernel: tpu_custom_call.1
$region0: #{tpu_custom_call.1}
  #allocation0 [shape = 'u32[]', space=smem, size = 0x4, offset = 0x4, fixed_abs, tag = 'smem constant byte address 0x4 - core index']
  #allocation1 [shape = 'u32[144,128]{1,0:T(1,128)}', space=vmem, size = 0x12000, scoped, tag = 'internal scratch']
  %s0 = inlined_call_operand.hbm [shape: f32[16,128], index: 0, kind: input, shape index: {}, may-alias: {0,1}]
  %s1 = inlined_call_operand.hbm [shape: f32[16,128], index: 1, kind: output, shape index: {}, may-alias: {0,1}]
  %s2 = sld [smem:[#allocation0]]
  $region18: #{tpu_custom_call.1} parent=0
    _
  %s4 = ssub.s32 1, %s2
  %s5 = scalar_select 0, %s4, %s2
  $region1: #{tpu_custom_call.1} parent=0
    #allocation2 [shape = 'u8[8192]{0}', space=vmem, size = 0x2000, scoped, tag = 'input window, operand 0, single buffered']
    #allocation3 [shape = 's32[1]{0}', space=sflag, size = 0x4, scoped, tag = 'scoped memory for tpu_custom_call.1']
    #allocation4 [shape = 's32[1]{0}', space=sflag, size = 0x4, scoped, tag = 'scoped memory for tpu_custom_call.1']
    #allocation5 [shape = 'u8[8192]{0}', space=vmem, size = 0x2000, scoped, tag = 'output window, operand 0, single buffered']
    %6 = vsyncpa [#allocation3], 0
    %7 = vsyncpa [#allocation4], 0
    // Predicated region
    $region2: #{tpu_custom_call.1} parent=1 // pred_check
      _
    $region3: #{tpu_custom_call.1} parent=1 // pred_check_branch
      %9 = sbr.rel (0) target = $region5
    $region4: #{tpu_custom_call.1} parent=1 // pred_region
      %s11 = ssub.s32 256, 256
      %12 = vsyncadd [#allocation3], %s11
      %s13 = sshll.u32 [#allocation2], 4
      %s14 = int_to_ptr.vmem [resolvable:$true] %s13
      %19 = dma.hbm_to_vmem [thread:$0]  %s0, 256, %s14, [#allocation3], 128, 128, 8
    $region5: #{tpu_custom_call.1} parent=1 // pred_fallthru
      _
    // Predicated region
    $region6: #{tpu_custom_call.1} parent=1 // pred_check
      _
    $region7: #{tpu_custom_call.1} parent=1 // pred_check_branch
      %21 = sbr.rel (0) target = $region9
    $region8: #{tpu_custom_call.1} parent=1 // pred_region
      %22 = dma.done [#allocation3], 256
    $region9: #{tpu_custom_call.1} parent=1 // pred_fallthru
      _
    %v23 = vld [vmem:[#allocation2] sm:$0xff]
    %v24 = vld [vmem:[#allocation2 + $0x8] sm:$0xff]
    %25 = vst [vmem:[#allocation5] sm:$0xff] %v23
    %26 = vst [vmem:[#allocation5 + $0x8] sm:$0xff] %v24
    // Predicated region
    $region10: #{tpu_custom_call.1} parent=1 // pred_check
      _
    $region11: #{tpu_custom_call.1} parent=1 // pred_check_branch
      %28 = sbr.rel (0) target = $region13
    $region12: #{tpu_custom_call.1} parent=1 // pred_region
      %s30 = ssub.s32 256, 256
      %31 = vsyncadd [#allocation4], %s30
      %s32 = sshll.u32 [#allocation5], 4
      %s33 = int_to_ptr.vmem [resolvable:$true] %s32
      %38 = dma.vmem_to_hbm [thread:$0]  %s33, 256, %s1, [#allocation4], 128, 128, 8
    $region13: #{tpu_custom_call.1} parent=1 // pred_fallthru
      _
    // Predicated region
    $region14: #{tpu_custom_call.1} parent=1 // pred_check
      _
    $region15: #{tpu_custom_call.1} parent=1 // pred_check_branch
      %40 = sbr.rel (0) target = $region17
    $region16: #{tpu_custom_call.1} parent=1 // pred_region
      %41 = dma.done [#allocation4], 256
    $region17: #{tpu_custom_call.1} parent=1 // pred_fallthru
      _
    %42 = vsyncpa [#allocation3], 1
    %43 = vsyncpa [#allocation4], 1

</llo_original>
